<compile_context>
chip_gen: v5e
topology: v5e:2x2
jax: 0.10.0
libtpu: 0.0.40
codegen_flags: <defaults>
</compile_context>

<pallas_src>
import functools

import jax
import jax.numpy as jnp
from jax.experimental import pallas as pl
from jax.experimental.pallas import tpu as pltpu

_LANES = 128
_MAX_TILE_ROWS = 2048          # 2048 x 128 x 4 B = 1 MiB per f32 block


def _round_up(a, b):
    return ((a + b - 1) // b) * b


def _gd_kernel_tpu(seed_ref, stddev_ref, x_ref, o_ref):
    """TPU path: generate N(0,1) noise in-kernel with the hardware PRNG."""
    # Grid-aware seeding: mix in the tile index so each row-tile draws
    # independent noise (a bare seed would replay the same pattern per tile).
    pltpu.prng_seed(seed_ref[0], pl.program_id(0))
    # noise ~ N(1, stddev^2); affine kept in f32.
    # NOTE(v7x): if profiling shows the single EUP slot binding on normal
    # generation at 3.2 TB/s HBM, swap stateful_normal for a cheaper
    # VPU-based bits->normal approximation from pltpu.prng_random_bits.
    noise = pltpu.stateful_normal(x_ref.shape, jnp.float32) * stddev_ref[0] + 1.0
    # Multiply in the input dtype (bf16 stays bf16 on v6e/v7x; f32 unchanged).
    o_ref[...] = (x_ref[...] * noise.astype(x_ref.dtype)).astype(o_ref.dtype)


def _gd_kernel_portable(stddev_ref, x_ref, noise_ref, o_ref):
    """Fallback path: pre-generated N(0,1) noise passed in as a tiled input."""
    noise = noise_ref[...] * stddev_ref[0] + 1.0
    o_ref[...] = (x_ref[...] * noise.astype(x_ref.dtype)).astype(o_ref.dtype)


@functools.partial(jax.jit, static_argnames=("training",))
def gaussian_dropout(x, rate, seed, training=True):
    """x: any-shape array (e.g. NCHW); rate: (1,) f32 param; seed: (1,) i32."""
    if not training:
        return x

    orig_shape = x.shape
    n = x.size

    # Lane-dense 2-D slab. Pad so rows % tile_rows == 0 (handles element
    # counts that are not multiples of 128); padded tail is sliced off after.
    rows = pl.cdiv(n, _LANES)
    grid_n = pl.cdiv(rows, _MAX_TILE_ROWS)
    tile_rows = _round_up(pl.cdiv(rows, grid_n), 8)
    rows_padded = tile_rows * grid_n
    n_padded = rows_padded * _LANES

    x_flat = x.reshape(-1)
    if n_padded != n:
        x_flat = jnp.pad(x_flat, (0, n_padded - n))
    x2d = x_flat.reshape(rows_padded, _LANES)

    # softplus of the learned scalar (O(1) work, done once in the wrapper).
    stddev = jax.nn.softplus(rate.astype(jnp.float32))

    grid = (grid_n,)
    block = pl.BlockSpec((tile_rows, _LANES), lambda i: (i, 0))

    if jax.default_backend() == "tpu":
        out2d = pl.pallas_call(
            _gd_kernel_tpu,
            out_shape=jax.ShapeDtypeStruct((rows_padded, _LANES), x.dtype),
            grid=grid,
            in_specs=[
                pl.BlockSpec(memory_space=pltpu.SMEM),   # seed   (1,) i32
                pl.BlockSpec(memory_space=pltpu.SMEM),   # stddev (1,) f32
                block,                                   # x row-tile
            ],
            out_specs=block,
            compiler_params=pltpu.CompilerParams(
                dimension_semantics=("parallel",),       # shard tiles across TCs
                vmem_limit_bytes=32 * 1024 * 1024,
            ),
            cost_estimate=pl.CostEstimate(
                flops=3 * n_padded,
                transcendentals=2 * n_padded,            # in-kernel normal gen
                bytes_accessed=2 * n_padded * x.dtype.itemsize,
            ),
        )(seed.astype(jnp.int32), stddev, x2d)
    else:
        # TODO(synk): pltpu.prng_seed / pltpu.stateful_normal have no lowering
        # off-TPU (plain interpret / CPU); generate the noise outside the
        # kernel there and apply it with a portable tiled kernel.
        key = jax.random.PRNGKey(seed.astype(jnp.int32)[0])
        noise = jax.random.normal(key, (rows_padded, _LANES), dtype=jnp.float32)
        out2d = pl.pallas_call(
            _gd_kernel_portable,
            out_shape=jax.ShapeDtypeStruct((rows_padded, _LANES), x.dtype),
            grid=grid,
            in_specs=[
                pl.BlockSpec(memory_space=pltpu.SMEM),   # stddev (1,) f32
                block,                                   # x row-tile
                block,                                   # noise row-tile
            ],
            out_specs=block,
        )(stddev, x2d, noise)

    return out2d.reshape(-1)[:n].reshape(orig_shape)


if __name__ == "__main__":
    key = jax.random.PRNGKey(0)
    # Deterministic parameter init matching the module: rate = tensor([1.0]).
    rate = jnp.array([1.0], dtype=jnp.float32)
    seed = jnp.array([0], dtype=jnp.int32)

    # Small NCHW input consistent with a conv-style feature map.
    x = jax.random.normal(key, (2, 4, 16, 16), dtype=jnp.float32)

    y = jax.block_until_ready(gaussian_dropout(x, rate, seed, training=True))

    # Shape / dtype preserved, values finite.
    assert y.shape == x.shape and y.dtype == x.dtype
    assert bool(jnp.all(jnp.isfinite(y)))

    # y / x recovers the multiplicative noise; check mean ~ 1, std ~ softplus(1).
    safe = jnp.abs(x) > 1e-6
    noise_hat = jnp.where(safe, y / jnp.where(safe, x, 1.0), 1.0)
    stddev_ref = float(jax.nn.softplus(rate)[0])          # ~1.3133
    assert abs(float(jnp.mean(noise_hat)) - 1.0) < 0.25
    assert abs(float(jnp.std(noise_hat)) - stddev_ref) < 0.4

    # Eval mode is identity.
    y_eval = jax.block_until_ready(gaussian_dropout(x, rate, seed, training=False))
    assert bool(jnp.all(y_eval == x))

    print("KERNEL_OK")
</pallas_src>

<mosaic_0001>
module attributes {stable_mosaic.version = 11 : i64} {
  func.func @_gd_kernel_portable(%arg0: i32, %arg1: memref<1xf32, #tpu.memory_space<smem>>, %arg2: memref<16x128xf32, #tpu.memory_space<vmem>>, %arg3: memref<16x128xf32, #tpu.memory_space<vmem>>, %arg4: memref<16x128xf32, #tpu.memory_space<vmem>>) attributes {dimension_semantics = [#tpu.dimension_semantics<arbitrary>], iteration_bounds = array<i64: 1>, scalar_prefetch = 0 : i64, scratch_operands = 0 : i64, tpu.core_type = #tpu.core_type<tc>, window_params = [{transform_indices = @transform_0, window_bounds = array<i64: 1>}, {transform_indices = @transform_1, window_bounds = array<i64: 16, 128>}, {transform_indices = @transform_2, window_bounds = array<i64: 16, 128>}, {transform_indices = @transform_3, window_bounds = array<i64: 16, 128>}]} {
    %c0 = arith.constant 0 : index
    %c0_0 = arith.constant 0 : index
    %0 = vector.load %arg3[%c0, %c0_0] : memref<16x128xf32, #tpu.memory_space<vmem>>, vector<16x128xf32>
    %c0_1 = arith.constant 0 : index
    %1 = memref.load %arg1[%c0_1] : memref<1xf32, #tpu.memory_space<smem>>
    %2 = vector.broadcast %1 : f32 to vector<16x128xf32>
    %3 = arith.mulf %0, %2 : vector<16x128xf32>
    %cst = arith.constant 1.000000e+00 : f32
    %4 = vector.broadcast %cst : f32 to vector<16x128xf32>
    %5 = arith.addf %3, %4 : vector<16x128xf32>
    %c0_2 = arith.constant 0 : index
    %c0_3 = arith.constant 0 : index
    %6 = vector.load %arg2[%c0_2, %c0_3] : memref<16x128xf32, #tpu.memory_space<vmem>>, vector<16x128xf32>
    %7 = arith.mulf %6, %5 : vector<16x128xf32>
    %c0_4 = arith.constant 0 : index
    %c0_5 = arith.constant 0 : index
    %8 = vector.load %arg4[%c0_4, %c0_5] : memref<16x128xf32, #tpu.memory_space<vmem>>, vector<16x128xf32>
    tpu.vector_store %arg4[%c0_4, %c0_5], %7 {strides = array<i32>} : memref<16x128xf32, #tpu.memory_space<vmem>>, vector<16x128xf32>,
    return
  }
  func.func @transform_0(%arg0: i32) -> i32 {
    %c0_i32 = arith.constant 0 : i32
    %c0_i32_0 = arith.constant 0 : i32
    return %c0_i32 : i32
  }
  func.func @transform_1(%arg0: i32) -> (i32, i32) {
    %c0_i32 = arith.constant 0 : i32
    %c0_i32_0 = arith.constant 0 : i32
    return %arg0, %c0_i32 : i32, i32
  }
  func.func @transform_2(%arg0: i32) -> (i32, i32) {
    %c0_i32 = arith.constant 0 : i32
    %c0_i32_0 = arith.constant 0 : i32
    return %arg0, %c0_i32 : i32, i32
  }
  func.func @transform_3(%arg0: i32) -> (i32, i32) {
    %c0_i32 = arith.constant 0 : i32
    %c0_i32_0 = arith.constant 0 : i32
    return %arg0, %c0_i32 : i32, i32
  }
}

</mosaic_0001>

<llo_original>
// kernel: gaussian_dropout.1
$region0: #{gaussian_dropout.1}
  #allocation0 [shape = 'u32[]', space=smem, size = 0x4, offset = 0x4, fixed_abs, tag = 'smem constant byte address 0x4 - core index']
  #allocation1 [shape = 'u32[72,128]{1,0:T(1,128)}', space=vmem, size = 0x9000, scoped, tag = 'internal scratch']
  #allocation2 [shape = 'f32[1]{0:T(128)S(6)}', space=smem, size = 0x200, scoped, tag = 'scoped memory for gaussian_dropout.1']
  %s0 = inlined_call_operand.<no memory space> [shape: f32[1], index: 0, kind: input, shape index: {}]
  %s1 = inlined_call_operand.vmem [shape: f32[16,128], index: 1, kind: input, shape index: {}]
  %s2 = inlined_call_operand.vmem [shape: f32[16,128], index: 2, kind: input, shape index: {}]
  %s3 = inlined_call_operand.vmem [shape: f32[16,128], index: 3, kind: output, shape index: {}]
  %s4 = sld [smem:[#allocation0]]
  $region22: #{gaussian_dropout.1} parent=0
    _
  %s6 = ssub.s32 1, %s4
  %s7 = scalar_select 0, %s6, %s4
  %8 = sst [smem:[#allocation2]] %s0
  // Predicated region
  $region2: #{gaussian_dropout.1} parent=0 // pred_check
    _
  $region3: #{gaussian_dropout.1} parent=0 // pred_check_branch
    %10 = sbr.rel (0) target = $region5
  $region4: #{gaussian_dropout.1} parent=0 // pred_region
    _
  $region5: #{gaussian_dropout.1} parent=0 // pred_fallthru
    _
  // Predicated region
  $region6: #{gaussian_dropout.1} parent=0 // pred_check
    _
  $region7: #{gaussian_dropout.1} parent=0 // pred_check_branch
    %12 = sbr.rel (0) target = $region9
  $region8: #{gaussian_dropout.1} parent=0 // pred_region
    _
  $region9: #{gaussian_dropout.1} parent=0 // pred_fallthru
    _
  // Predicated region
  $region10: #{gaussian_dropout.1} parent=0 // pred_check
    _
  $region11: #{gaussian_dropout.1} parent=0 // pred_check_branch
    %14 = sbr.rel (0) target = $region13
  $region12: #{gaussian_dropout.1} parent=0 // pred_region
    _
  $region13: #{gaussian_dropout.1} parent=0 // pred_fallthru
    _
  %v15 = vld [vmem:[%s2] sm:$0xff]
  %v16 = vld [vmem:[%s2 + $0x8] sm:$0xff]
  %s17 = sld [smem:[#allocation2]]
  %v18 = vstv %s17
  %v19 = vmul.f32 %v15, %v18
  %v20 = vmul.f32 %v16, %v18
  %v21 = vadd.f32 %v19, 1.0
  %v22 = vadd.f32 %v20, 1.0
  %v23 = vld [vmem:[%s1] sm:$0xff]
  %v24 = vld [vmem:[%s1 + $0x8] sm:$0xff]
  %v25 = vmul.f32 %v23, %v21
  %v26 = vmul.f32 %v24, %v22
  %27 = vst [vmem:[%s3] sm:$0xff] %v25
  %28 = vst [vmem:[%s3 + $0x8] sm:$0xff] %v26
  // Predicated region
  $region14: #{gaussian_dropout.1} parent=0 // pred_check
    _
  $region15: #{gaussian_dropout.1} parent=0 // pred_check_branch
    %30 = sbr.rel (0) target = $region17
  $region16: #{gaussian_dropout.1} parent=0 // pred_region
    _
  $region17: #{gaussian_dropout.1} parent=0 // pred_fallthru
    _
  // Predicated region
  $region18: #{gaussian_dropout.1} parent=0 // pred_check
    _
  $region19: #{gaussian_dropout.1} parent=0 // pred_check_branch
    %32 = sbr.rel (0) target = $region21
  $region20: #{gaussian_dropout.1} parent=0 // pred_region
    _
  $region21: #{gaussian_dropout.1} parent=0 // pred_fallthru
    _

</llo_original>
